<compile_context>
chip_gen: v6e
topology: v6e:2x2x1
jax: 0.10.0
libtpu: 0.0.40
codegen_flags: <defaults>
</compile_context>

<pallas_src>
import functools

import jax
import jax.numpy as jnp
from jax.experimental import pallas as pl
from jax.experimental.pallas import tpu as pltpu


def _round_up(x, m):
    return (x + m - 1) // m * m


def _fused_foo_kernel(xs_ref, w1s_ref, w2s_ref, o_ref, a_stack_ref, *,
                      shifts, c1_p, m2):
    """relu(conv2(relu(conv1(x)))) with both convs as single K-stacked MXU dots.

      xs_ref     : (KH*KW*CIN_P, M1_P)  pre-shifted, tap-stacked conv1 operand
                   (built in the wrapper); a constant-1 channel carries b1.
      w1s_ref    : (C1_P, KH*KW*CIN_P)  stacked conv1 weights; row C1 emits a
                   constant-1 activation row that carries b2 for conv2.
      w2s_ref    : (C2, KH*KW*C1_P)     stacked conv2 weights (b2 folded in).
      o_ref      : (C2, M2)             lane-dense output; invalid cols garbage.
      a_stack_ref: (KH*KW*C1_P, M2)     VMEM scratch: shifted slices of conv1 out.
    """
    # conv1 + bias + ReLU as ONE MXU dot (bias rides the constant-1 channel,
    # so there is no separate VALU bias pass and no (C,1) broadcast).
    a = jnp.maximum(
        jnp.dot(w1s_ref[...], xs_ref[...], preferred_element_type=jnp.float32),
        0.0)

    # Build conv2's K-stacked operand once: 9 lane-shifted slices of `a` into
    # the VMEM scratch (the rotations are needed either way; doing them once
    # here instead of as 9 accumulating dots cuts MXU issues / pops ~9x).
    for t, shift in enumerate(shifts):
        a_stack_ref[t * c1_p:(t + 1) * c1_p, :] = a[:, shift:shift + m2]

    # conv2 + bias + ReLU as ONE MXU dot.
    o_ref[...] = jnp.maximum(
        jnp.dot(w2s_ref[...], a_stack_ref[...],
                preferred_element_type=jnp.float32),
        0.0)


def init_params(key):
    """Deterministic parameters matching Conv2d(3,6,3) and Conv2d(6,16,3)."""
    k1, k2, k3, k4 = jax.random.split(key, 4)
    # stored HWIO (PyTorch stores OIHW; layout conversion is just bookkeeping)
    w1 = 0.1 * jax.random.normal(k1, (3, 3, 3, 6), dtype=jnp.float32)
    b1 = 0.1 * jax.random.normal(k2, (6,), dtype=jnp.float32)
    w2 = 0.1 * jax.random.normal(k3, (3, 3, 6, 16), dtype=jnp.float32)
    b2 = 0.1 * jax.random.normal(k4, (16,), dtype=jnp.float32)
    return (w1, b1, w2, b2)


@jax.jit
def baz_forward(x_nchw, w1, b1, w2, b2):
    """Baz.forward: returns (x, Foo(x)).  x is NCHW float32."""
    N, Cin, H, W = x_nchw.shape
    KH, KW, _, C1 = w1.shape
    C2 = w2.shape[3]
    OH1, OW1 = H - KH + 1, W - KW + 1          # conv1 valid output
    OH2, OW2 = OH1 - KH + 1, OW1 - KW + 1      # conv2 valid output
    # Static guards: valid outputs of the 3x3+3x3 tap stack must stay inside a
    # single image so the flattened shifted-slice trick never reads cross-batch.
    assert OH2 >= 1 and OW2 >= 1, "input spatially too small for two VALID convs"

    CIN_P = _round_up(Cin + 1, 8)              # +1 -> constant-1 channel (b1)
    C1_P = _round_up(C1 + 1, 8)                # +1 -> constant-1 act row (b2)
    n_taps = KH * KW
    K1, K2 = n_taps * CIN_P, n_taps * C1_P     # stacked contraction depths

    M2 = N * H * W                             # flattened output columns (lanes)
    SHIFT_MAX = (KH - 1) * W + (KW - 1)        # max shifted-slice offset
    M1 = M2 + SHIFT_MAX                        # conv1 columns conv2 reads
    M1_P = _round_up(M1, 128)                  # lane-aligned conv1 output width
    shifts = tuple((t // KW) * W + (t % KW) for t in range(n_taps))

    f32 = jnp.float32
    # Channels-major, spatially-flattened input with a constant-1 bias channel,
    # then pre-shifted + tap-stacked along the contraction axis in the wrapper
    # (no lane-misaligned slicing for conv1 inside the kernel).
    xf = jnp.transpose(x_nchw, (1, 0, 2, 3)).reshape(Cin, M2).astype(f32)
    xf = jnp.concatenate(
        [xf, jnp.ones((1, M2), f32), jnp.zeros((CIN_P - Cin - 1, M2), f32)],
        axis=0)
    xf = jnp.pad(xf, ((0, 0), (0, SHIFT_MAX + M1_P - M2)))
    xs = jnp.concatenate([xf[:, s:s + M1_P] for s in shifts], axis=0)  # (K1, M1_P)

    # Stacked, lane-dense conv1 weights (C1_P, K1): b1 in tap-0's constant-1
    # column; row C1 turns the conv1 output's row C1 into an all-ones row
    # (ReLU-stable) so conv2's bias can ride the same matmul trick.
    w1_t = jnp.transpose(w1, (3, 0, 1, 2)).reshape(C1, n_taps, Cin).astype(f32)
    w1s = jnp.zeros((C1_P, n_taps, CIN_P), f32)
    w1s = w1s.at[:C1, :, :Cin].set(w1_t)
    w1s = w1s.at[:C1, 0, Cin].set(b1.astype(f32))
    w1s = w1s.at[C1, 0, Cin].set(1.0)
    w1s = w1s.reshape(C1_P, K1)

    # Stacked conv2 weights (C2, K2): b2 in tap-0's constant-1 column.
    w2_t = jnp.transpose(w2, (3, 0, 1, 2)).reshape(C2, n_taps, C1).astype(f32)
    w2s = jnp.zeros((C2, n_taps, C1_P), f32)
    w2s = w2s.at[:, :, :C1].set(w2_t)
    w2s = w2s.at[:, 0, C1].set(b2.astype(f32))
    w2s = w2s.reshape(C2, K2)

    kernel = functools.partial(_fused_foo_kernel,
                               shifts=shifts, c1_p=C1_P, m2=M2)

    flops = 2 * (C1_P * K1 * M1_P + C2 * K2 * M2)
    bytes_accessed = 4 * (K1 * M1_P + C1_P * K1 + C2 * K2 + C2 * M2)

    # Single-shot kernel (grid=()): every operand fits in VMEM as a whole-array
    # block (~350 KB total incl. scratch), so no pipeline prologue/epilogue.
    # TODO(synk): if N*H*W grows large, tile the lane (M) axis with a grid of
    # >=128-lane blocks + dimension_semantics=("parallel",) for v7x's 2 TCs,
    # sizing tiles against v7x's 64 MiB VMEM with 2x double-buffering/operand.
    y_flat = pl.pallas_call(
        kernel,
        out_shape=jax.ShapeDtypeStruct((C2, M2), f32),
        scratch_shapes=[pltpu.VMEM((K2, M2), f32)],
        cost_estimate=pl.CostEstimate(flops=flops, transcendentals=0,
                                      bytes_accessed=bytes_accessed),
    )(xs, w1s, w2s)

    # (C2, N*H*W) -> NCHW, keep only the valid (VALID-padding, stride-1) window.
    y_nchw = y_flat.reshape(C2, N, H, W).transpose(1, 0, 2, 3)[:, :, :OH2, :OW2]
    return x_nchw, y_nchw


def _reference(x_nchw, w1, b1, w2, b2):
    """Pure-JAX reference using lax.conv (for correctness check only)."""
    def conv(x, w_hwio, b):
        w_oihw = jnp.transpose(w_hwio, (3, 2, 0, 1))
        out = jax.lax.conv_general_dilated(
            x, w_oihw, window_strides=(1, 1), padding="VALID",
            dimension_numbers=("NCHW", "OIHW", "NCHW"))
        return jnp.maximum(out + b[None, :, None, None], 0.0)
    a = conv(x_nchw, w1, b1)
    return x_nchw, conv(a, w2, b2)


if __name__ == "__main__":
    key = jax.random.PRNGKey(0)
    kx, kp = jax.random.split(key)
    x = jax.random.normal(kx, (2, 3, 16, 16), dtype=jnp.float32)  # NCHW
    w1, b1, w2, b2 = init_params(kp)

    x_out, y_out = baz_forward(x, w1, b1, w2, b2)
    jax.block_until_ready((x_out, y_out))

    x_ref, y_ref = _reference(x, w1, b1, w2, b2)
    assert x_out.shape == (2, 3, 16, 16)
    assert y_out.shape == (2, 16, 12, 12)
    assert jnp.allclose(x_out, x_ref)
    assert jnp.allclose(y_out, y_ref, atol=1e-4, rtol=1e-4)

    print("KERNEL_OK")
</pallas_src>

<mosaic_0001>
module attributes {stable_mosaic.version = 11 : i64} {
  func.func @_fused_foo_kernel(%arg0: memref<72x640xf32, #tpu.memory_space<vmem>>, %arg1: memref<8x72xf32, #tpu.memory_space<vmem>>, %arg2: memref<16x72xf32, #tpu.memory_space<vmem>>, %arg3: memref<16x512xf32, #tpu.memory_space<vmem>>, %arg4: memref<72x512xf32, #tpu.memory_space<vmem>>) attributes {dimension_semantics = [], scalar_prefetch = 0 : i64, scratch_operands = 1 : i64, tpu.core_type = #tpu.core_type<tc>} {
    %c0 = arith.constant 0 : index
    %c0_0 = arith.constant 0 : index
    %0 = vector.load %arg1[%c0, %c0_0] : memref<8x72xf32, #tpu.memory_space<vmem>>, vector<8x72xf32>
    %c0_1 = arith.constant 0 : index
    %c0_2 = arith.constant 0 : index
    %1 = vector.load %arg0[%c0_1, %c0_2] : memref<72x640xf32, #tpu.memory_space<vmem>>, vector<72x640xf32>
    %cst = arith.constant dense<0.000000e+00> : vector<8x640xf32>
    %2 = tpu.matmul %0, %1, %cst {dimension_numbers = #tpu.dot_dimension_numbers<[1], [0], [0], [1], [0, 0, 1, 1], [], []>} : vector<8x72xf32>, vector<72x640xf32>, vector<8x640xf32> -> vector<8x640xf32>
    %cst_3 = arith.constant 0.000000e+00 : f32
    %3 = vector.broadcast %cst_3 : f32 to vector<8x640xf32>
    %4 = arith.maximumf %2, %3 : vector<8x640xf32>
    %5 = vector.extract_strided_slice %4 {offsets = [0, 0], sizes = [8, 512], strides = [1, 1]} : vector<8x640xf32> to vector<8x512xf32>
    %c0_4 = arith.constant 0 : index
    %c0_5 = arith.constant 0 : index
    %6 = vector.load %arg4[%c0_4, %c0_5] : memref<72x512xf32, #tpu.memory_space<vmem>>, vector<8x512xf32>
    tpu.vector_store %arg4[%c0_4, %c0_5], %5 {strides = array<i32>} : memref<72x512xf32, #tpu.memory_space<vmem>>, vector<8x512xf32>,
    %7 = vector.extract_strided_slice %4 {offsets = [0, 1], sizes = [8, 512], strides = [1, 1]} : vector<8x640xf32> to vector<8x512xf32>
    %c8 = arith.constant 8 : index
    %c0_6 = arith.constant 0 : index
    %8 = vector.load %arg4[%c8, %c0_6] : memref<72x512xf32, #tpu.memory_space<vmem>>, vector<8x512xf32>
    tpu.vector_store %arg4[%c8, %c0_6], %7 {strides = array<i32>} : memref<72x512xf32, #tpu.memory_space<vmem>>, vector<8x512xf32>,
    %9 = vector.extract_strided_slice %4 {offsets = [0, 2], sizes = [8, 512], strides = [1, 1]} : vector<8x640xf32> to vector<8x512xf32>
    %c16 = arith.constant 16 : index
    %c0_7 = arith.constant 0 : index
    %10 = vector.load %arg4[%c16, %c0_7] : memref<72x512xf32, #tpu.memory_space<vmem>>, vector<8x512xf32>
    tpu.vector_store %arg4[%c16, %c0_7], %9 {strides = array<i32>} : memref<72x512xf32, #tpu.memory_space<vmem>>, vector<8x512xf32>,
    %11 = vector.extract_strided_slice %4 {offsets = [0, 16], sizes = [8, 512], strides = [1, 1]} : vector<8x640xf32> to vector<8x512xf32>
    %c24 = arith.constant 24 : index
    %c0_8 = arith.constant 0 : index
    %12 = vector.load %arg4[%c24, %c0_8] : memref<72x512xf32, #tpu.memory_space<vmem>>, vector<8x512xf32>
    tpu.vector_store %arg4[%c24, %c0_8], %11 {strides = array<i32>} : memref<72x512xf32, #tpu.memory_space<vmem>>, vector<8x512xf32>,
    %13 = vector.extract_strided_slice %4 {offsets = [0, 17], sizes = [8, 512], strides = [1, 1]} : vector<8x640xf32> to vector<8x512xf32>
    %c32 = arith.constant 32 : index
    %c0_9 = arith.constant 0 : index
    %14 = vector.load %arg4[%c32, %c0_9] : memref<72x512xf32, #tpu.memory_space<vmem>>, vector<8x512xf32>
    tpu.vector_store %arg4[%c32, %c0_9], %13 {strides = array<i32>} : memref<72x512xf32, #tpu.memory_space<vmem>>, vector<8x512xf32>,
    %15 = vector.extract_strided_slice %4 {offsets = [0, 18], sizes = [8, 512], strides = [1, 1]} : vector<8x640xf32> to vector<8x512xf32>
    %c40 = arith.constant 40 : index
    %c0_10 = arith.constant 0 : index
    %16 = vector.load %arg4[%c40, %c0_10] : memref<72x512xf32, #tpu.memory_space<vmem>>, vector<8x512xf32>
    tpu.vector_store %arg4[%c40, %c0_10], %15 {strides = array<i32>} : memref<72x512xf32, #tpu.memory_space<vmem>>, vector<8x512xf32>,
    %17 = vector.extract_strided_slice %4 {offsets = [0, 32], sizes = [8, 512], strides = [1, 1]} : vector<8x640xf32> to vector<8x512xf32>
    %c48 = arith.constant 48 : index
    %c0_11 = arith.constant 0 : index
    %18 = vector.load %arg4[%c48, %c0_11] : memref<72x512xf32, #tpu.memory_space<vmem>>, vector<8x512xf32>
    tpu.vector_store %arg4[%c48, %c0_11], %17 {strides = array<i32>} : memref<72x512xf32, #tpu.memory_space<vmem>>, vector<8x512xf32>,
    %19 = vector.extract_strided_slice %4 {offsets = [0, 33], sizes = [8, 512], strides = [1, 1]} : vector<8x640xf32> to vector<8x512xf32>
    %c56 = arith.constant 56 : index
    %c0_12 = arith.constant 0 : index
    %20 = vector.load %arg4[%c56, %c0_12] : memref<72x512xf32, #tpu.memory_space<vmem>>, vector<8x512xf32>
    tpu.vector_store %arg4[%c56, %c0_12], %19 {strides = array<i32>} : memref<72x512xf32, #tpu.memory_space<vmem>>, vector<8x512xf32>,
    %21 = vector.extract_strided_slice %4 {offsets = [0, 34], sizes = [8, 512], strides = [1, 1]} : vector<8x640xf32> to vector<8x512xf32>
    %c64 = arith.constant 64 : index
    %c0_13 = arith.constant 0 : index
    %22 = vector.load %arg4[%c64, %c0_13] : memref<72x512xf32, #tpu.memory_space<vmem>>, vector<8x512xf32>
    tpu.vector_store %arg4[%c64, %c0_13], %21 {strides = array<i32>} : memref<72x512xf32, #tpu.memory_space<vmem>>, vector<8x512xf32>,
    %c0_14 = arith.constant 0 : index
    %c0_15 = arith.constant 0 : index
    %23 = vector.load %arg2[%c0_14, %c0_15] : memref<16x72xf32, #tpu.memory_space<vmem>>, vector<16x72xf32>
    %c0_16 = arith.constant 0 : index
    %c0_17 = arith.constant 0 : index
    %24 = vector.load %arg4[%c0_16, %c0_17] : memref<72x512xf32, #tpu.memory_space<vmem>>, vector<72x512xf32>
    %cst_18 = arith.constant dense<0.000000e+00> : vector<16x512xf32>
    %25 = tpu.matmul %23, %24, %cst_18 {dimension_numbers = #tpu.dot_dimension_numbers<[1], [0], [0], [1], [0, 0, 1, 1], [], []>} : vector<16x72xf32>, vector<72x512xf32>, vector<16x512xf32> -> vector<16x512xf32>
    %cst_19 = arith.constant 0.000000e+00 : f32
    %26 = vector.broadcast %cst_19 : f32 to vector<16x512xf32>
    %27 = arith.maximumf %25, %26 : vector<16x512xf32>
    %c0_20 = arith.constant 0 : index
    %c0_21 = arith.constant 0 : index
    %28 = vector.load %arg3[%c0_20, %c0_21] : memref<16x512xf32, #tpu.memory_space<vmem>>, vector<16x512xf32>
    tpu.vector_store %arg3[%c0_20, %c0_21], %27 {strides = array<i32>} : memref<16x512xf32, #tpu.memory_space<vmem>>, vector<16x512xf32>,
    return
  }
}

</mosaic_0001>

<llo_original>
// kernel: baz_forward.1
$region0: #{baz_forward.1}
  #allocation0 [shape = 'u32[]', space=smem, size = 0x4, offset = 0x4, fixed_abs, tag = 'smem constant byte address 0x4 - core index']
  #allocation1 [shape = 'u32[144,128]{1,0:T(1,128)}', space=vmem, size = 0x12000, scoped, tag = 'internal scratch']
  #allocation2 [shape = 'f32[72,512]{1,0:T(8,128)}', space=vmem, size = 0x24000, scoped, tag = 'scratch operand']
  %s0 = inlined_call_operand.vmem [shape: f32[72,640], index: 0, kind: input, shape index: {}]
  %s1 = inlined_call_operand.vmem [shape: f32[8,72], index: 1, kind: input, shape index: {}]
  %s2 = inlined_call_operand.vmem [shape: f32[16,72], index: 2, kind: input, shape index: {}]
  %s3 = inlined_call_operand.vmem [shape: f32[16,512], index: 3, kind: output, shape index: {}]
  %s4 = sld [smem:[#allocation0]]
  $region22: #{baz_forward.1} parent=0
    _
  %s6 = ssub.s32 1, %s4
  %s7 = scalar_select 0, %s6, %s4
  // Predicated region
  $region2: #{baz_forward.1} parent=0 // pred_check
    _
  $region3: #{baz_forward.1} parent=0 // pred_check_branch
    %9 = sbr.rel (0) target = $region5
  $region4: #{baz_forward.1} parent=0 // pred_region
    _
  $region5: #{baz_forward.1} parent=0 // pred_fallthru
    _
  // Predicated region
  $region6: #{baz_forward.1} parent=0 // pred_check
    _
  $region7: #{baz_forward.1} parent=0 // pred_check_branch
    %11 = sbr.rel (0) target = $region9
  $region8: #{baz_forward.1} parent=0 // pred_region
    _
  $region9: #{baz_forward.1} parent=0 // pred_fallthru
    _
  // Predicated region
  $region10: #{baz_forward.1} parent=0 // pred_check
    _
  $region11: #{baz_forward.1} parent=0 // pred_check_branch
    %13 = sbr.rel (0) target = $region13
  $region12: #{baz_forward.1} parent=0 // pred_region
    _
  $region13: #{baz_forward.1} parent=0 // pred_fallthru
    _
  %v14 = vld [vmem:[%s1] sm:$0xff]
  %v15 = vld [vmem:[%s0] sm:$0xff]
  %v16 = vld [vmem:[%s0 + $0x8] sm:$0xff]
  %v17 = vld [vmem:[%s0 + $0x10] sm:$0xff]
  %v18 = vld [vmem:[%s0 + $0x18] sm:$0xff]
  %v19 = vld [vmem:[%s0 + $0x20] sm:$0xff]
  %v20 = vld [vmem:[%s0 + $0x28] sm:$0xff]
  %v21 = vld [vmem:[%s0 + $0x30] sm:$0xff]
  %v22 = vld [vmem:[%s0 + $0x38] sm:$0xff]
  %v23 = vld [vmem:[%s0 + $0x40] sm:$0xff]
  %v24 = vld [vmem:[%s0 + $0x48] sm:$0xff]
  %v25 = vld [vmem:[%s0 + $0x50] sm:$0xff]
  %v26 = vld [vmem:[%s0 + $0x58] sm:$0xff]
  %v27 = vld [vmem:[%s0 + $0x60] sm:$0xff]
  %v28 = vld [vmem:[%s0 + $0x68] sm:$0xff]
  %v29 = vld [vmem:[%s0 + $0x70] sm:$0xff]
  %v30 = vld [vmem:[%s0 + $0x78] sm:$0xff]
  %v31 = vld [vmem:[%s0 + $0x80] sm:$0xff]
  %v32 = vld [vmem:[%s0 + $0x88] sm:$0xff]
  %v33 = vld [vmem:[%s0 + $0x90] sm:$0xff]
  %v34 = vld [vmem:[%s0 + $0x98] sm:$0xff]
  %v35 = vld [vmem:[%s0 + $0xa0] sm:$0xff]
  %v36 = vld [vmem:[%s0 + $0xa8] sm:$0xff]
  %v37 = vld [vmem:[%s0 + $0xb0] sm:$0xff]
  %v38 = vld [vmem:[%s0 + $0xb8] sm:$0xff]
  %v39 = vld [vmem:[%s0 + $0xc0] sm:$0xff]
  %v40 = vld [vmem:[%s0 + $0xc8] sm:$0xff]
  %v41 = vld [vmem:[%s0 + $0xd0] sm:$0xff]
  %v42 = vld [vmem:[%s0 + $0xd8] sm:$0xff]
  %v43 = vld [vmem:[%s0 + $0xe0] sm:$0xff]
  %v44 = vld [vmem:[%s0 + $0xe8] sm:$0xff]
  %v45 = vld [vmem:[%s0 + $0xf0] sm:$0xff]
  %v46 = vld [vmem:[%s0 + $0xf8] sm:$0xff]
  %v47 = vld [vmem:[%s0 + $0x100] sm:$0xff]
  %v48 = vld [vmem:[%s0 + $0x108] sm:$0xff]
  %v49 = vld [vmem:[%s0 + $0x110] sm:$0xff]
  %v50 = vld [vmem:[%s0 + $0x118] sm:$0xff]
  %v51 = vld [vmem:[%s0 + $0x120] sm:$0xff]
  %v52 = vld [vmem:[%s0 + $0x128] sm:$0xff]
  %v53 = vld [vmem:[%s0 + $0x130] sm:$0xff]
  %v54 = vld [vmem:[%s0 + $0x138] sm:$0xff]
  %v55 = vld [vmem:[%s0 + $0x140] sm:$0xff]
  %v56 = vld [vmem:[%s0 + $0x148] sm:$0xff]
  %v57 = vld [vmem:[%s0 + $0x150] sm:$0xff]
  %v58 = vld [vmem:[%s0 + $0x158] sm:$0xff]
  %v59 = vld [vmem:[%s0 + $0x160] sm:$0xff]
  %vm60 = vcmask 588800
  %v62 = vsel %vm60, %v14, 0
  %64 = vmatprep.subr.mxu0 0.0
  %65 = vmatpush1.msra.mxu0 0.0
  %66 = vmatprep.subr.mxu0 0.0
  %67 = vmatpush1.msra.mxu0 0.0
  %68 = vmatprep.subr.mxu0 0.0
  %69 = vmatpush1.msra.mxu0 0.0
  %70 = vmatprep.subr.mxu0 0.0
  %71 = vmatpush1.msra.mxu0 0.0
  %72 = vmatprep.subr.mxu0 0.0
  %73 = vmatpush1.msra.mxu0 0.0
  %74 = vmatprep.subr.mxu0 0.0
  %75 = vmatpush1.msra.mxu0 0.0
  %76 = vmatprep.subr.mxu0 0.0
  %77 = vmatpush1.msra.mxu0 0.0
  %78 = vmatprep.subr.mxu0 %v56
  %79 = vmatpush1.msra.mxu0 %v55
  %80 = vmatprep.subr.mxu0 %v51
  %81 = vmatpush1.msra.mxu0 %v50
  %82 = vmatprep.subr.mxu0 %v46
  %83 = vmatpush1.msra.mxu0 %v45
  %84 = vmatprep.subr.mxu0 %v41
  %85 = vmatpush1.msra.mxu0 %v40
  %86 = vmatprep.subr.mxu0 %v36
  %87 = vmatpush1.msra.mxu0 %v35
  %88 = vmatprep.subr.mxu0 %v31
  %89 = vmatpush1.msra.mxu0 %v30
  %90 = vmatprep.subr.mxu0 %v26
  %91 = vmatpush1.msra.mxu0 %v25
  %92 = vmatprep.subr.mxu0 %v21
  %93 = vmatpush1.msra.mxu0 %v20
  %94 = vmatprep.subr.mxu0 %v16
  %95 = vmatpush1.msra.mxu0 %v15
  %96 = vmatprep.subr.mxu0 0.0
  %97 = vmatpush2.msra.mxu0 0.0
  %98 = vmatprep.subr.mxu0 0.0
  %99 = vmatpush2.msra.mxu0 0.0
  %100 = vmatprep.subr.mxu0 0.0
  %101 = vmatpush2.msra.mxu0 0.0
  %102 = vmatprep.subr.mxu0 0.0
  %103 = vmatpush2.msra.mxu0 0.0
  %104 = vmatprep.subr.mxu0 0.0
  %105 = vmatpush2.msra.mxu0 0.0
  %106 = vmatprep.subr.mxu0 0.0
  %107 = vmatpush2.msra.mxu0 0.0
  %108 = vmatprep.subr.mxu0 0.0
  %109 = vmatpush2.msra.mxu0 0.0
  %110 = vmatprep.subr.mxu0 0.0
  %111 = vmatpush2.msra.mxu0 0.0
  %112 = vmatprep.subr.mxu0 0.0
  %113 = vmatpush2.msra.mxu0 0.0
  %114 = vmatprep.subr.mxu0 0.0
  %115 = vmatpush2.msra.mxu0 0.0
  %116 = vmatprep.subr.mxu0 0.0
  %117 = vmatpush2.msra.mxu0 0.0
  %118 = vmatprep.subr.mxu0 0.0
  %119 = vmatpush2.msra.mxu0 0.0
  %120 = vmatprep.subr.mxu0 0.0
  %121 = vmatpush2.msra.mxu0 0.0
  %122 = vmatprep.subr.mxu0 0.0
  %123 = vmatpush2.msra.mxu0 0.0
  %124 = vmatprep.subr.mxu0 0.0
  %125 = vmatpush2.msra.mxu0 0.0
  %126 = vmatprep.subr.mxu0 0.0
  %127 = vmatpush2.msra.mxu0 0.0
  %128 = vmatprep.mubr.f32.mxu0 0.0
  %129 = vmatmul.mubr.f32.gmra.mxu0 %v62
  %v130 = vpop.f32.mrf.mxu0
  %v131 = vadd.f32 0.0, %v130
  %v132 = vpop.f32.mrf.mxu0
  %v133 = vadd.f32 0.0, %v132
  %134 = vdwg.mxu0
  %135 = vmatprep.subr.mxu0 0.0
  %136 = vmatpush1.msra.mxu0 0.0
  %137 = vmatprep.subr.mxu0 0.0
  %138 = vmatpush1.msra.mxu0 0.0
  %139 = vmatprep.subr.mxu0 0.0
  %140 = vmatpush1.msra.mxu0 0.0
  %141 = vmatprep.subr.mxu0 0.0
  %142 = vmatpush1.msra.mxu0 0.0
  %143 = vmatprep.subr.mxu0 0.0
  %144 = vmatpush1.msra.mxu0 0.0
  %145 = vmatprep.subr.mxu0 0.0
  %146 = vmatpush1.msra.mxu0 0.0
  %147 = vmatprep.subr.mxu0 0.0
  %148 = vmatpush1.msra.mxu0 0.0
  %149 = vmatprep.subr.mxu0 %v58
  %150 = vmatpush1.msra.mxu0 %v57
  %151 = vmatprep.subr.mxu0 %v53
  %152 = vmatpush1.msra.mxu0 %v52
  %153 = vmatprep.subr.mxu0 %v48
  %154 = vmatpush1.msra.mxu0 %v47
  %155 = vmatprep.subr.mxu0 %v43
  %156 = vmatpush1.msra.mxu0 %v42
  %157 = vmatprep.subr.mxu0 %v38
  %158 = vmatpush1.msra.mxu0 %v37
  %159 = vmatprep.subr.mxu0 %v33
  %160 = vmatpush1.msra.mxu0 %v32
  %161 = vmatprep.subr.mxu0 %v28
  %162 = vmatpush1.msra.mxu0 %v27
  %163 = vmatprep.subr.mxu0 %v23
  %164 = vmatpush1.msra.mxu0 %v22
  %165 = vmatprep.subr.mxu0 %v18
  %166 = vmatpush1.msra.mxu0 %v17
  %167 = vmatprep.subr.mxu0 0.0
  %168 = vmatpush2.msra.mxu0 0.0
  %169 = vmatprep.subr.mxu0 0.0
  %170 = vmatpush2.msra.mxu0 0.0
  %171 = vmatprep.subr.mxu0 0.0
  %172 = vmatpush2.msra.mxu0 0.0
  %173 = vmatprep.subr.mxu0 0.0
  %174 = vmatpush2.msra.mxu0 0.0
  %175 = vmatprep.subr.mxu0 0.0
  %176 = vmatpush2.msra.mxu0 0.0
  %177 = vmatprep.subr.mxu0 0.0
  %178 = vmatpush2.msra.mxu0 0.0
  %179 = vmatprep.subr.mxu0 0.0
  %180 = vmatpush2.msra.mxu0 0.0
  %181 = vmatprep.subr.mxu0 0.0
  %182 = vmatpush2.msra.mxu0 0.0
  %183 = vmatprep.subr.mxu0 0.0
  %184 = vmatpush2.msra.mxu0 0.0
  %185 = vmatprep.subr.mxu0 0.0
  %186 = vmatpush2.msra.mxu0 0.0
  %187 = vmatprep.subr.mxu0 0.0
  %188 = vmatpush2.msra.mxu0 0.0
  %189 = vmatprep.subr.mxu0 0.0
  %190 = vmatpush2.msra.mxu0 0.0
  %191 = vmatprep.subr.mxu0 0.0
  %192 = vmatpush2.msra.mxu0 0.0
  %193 = vmatprep.subr.mxu0 0.0
  %194 = vmatpush2.msra.mxu0 0.0
  %195 = vmatprep.subr.mxu0 0.0
  %196 = vmatpush2.msra.mxu0 0.0
  %197 = vmatprep.subr.mxu0 0.0
  %198 = vmatpush2.msra.mxu0 0.0
  %199 = vmatprep.mubr.f32.mxu0 0.0
  %200 = vmatmul.mubr.f32.gmra.mxu0 %v62
  %v201 = vpop.f32.mrf.mxu0
  %v202 = vadd.f32 0.0, %v201
  %v203 = vpop.f32.mrf.mxu0
  %v204 = vadd.f32 0.0, %v203
  %205 = vdwg.mxu0
  %206 = vmatprep.subr.mxu0 0.0
  %207 = vmatpush1.msra.mxu0 0.0
  %208 = vmatprep.subr.mxu0 0.0
  %209 = vmatpush1.msra.mxu0 0.0
  %210 = vmatprep.subr.mxu0 0.0
  %211 = vmatpush1.msra.mxu0 0.0
  %212 = vmatprep.subr.mxu0 0.0
  %213 = vmatpush1.msra.mxu0 0.0
  %214 = vmatprep.subr.mxu0 0.0
  %215 = vmatpush1.msra.mxu0 0.0
  %216 = vmatprep.subr.mxu0 0.0
  %217 = vmatpush1.msra.mxu0 0.0
  %218 = vmatprep.subr.mxu0 0.0
  %219 = vmatpush1.msra.mxu0 0.0
  %220 = vmatprep.subr.mxu0 0.0
  %221 = vmatpush1.msra.mxu0 %v59
  %222 = vmatprep.subr.mxu0 0.0
  %223 = vmatpush1.msra.mxu0 %v54
  %224 = vmatprep.subr.mxu0 0.0
  %225 = vmatpush1.msra.mxu0 %v49
  %226 = vmatprep.subr.mxu0 0.0
  %227 = vmatpush1.msra.mxu0 %v44
  %228 = vmatprep.subr.mxu0 0.0
  %229 = vmatpush1.msra.mxu0 %v39
  %230 = vmatprep.subr.mxu0 0.0
  %231 = vmatpush1.msra.mxu0 %v34
  %232 = vmatprep.subr.mxu0 0.0
  %233 = vmatpush1.msra.mxu0 %v29
  %234 = vmatprep.subr.mxu0 0.0
  %235 = vmatpush1.msra.mxu0 %v24
  %236 = vmatprep.subr.mxu0 0.0
  %237 = vmatpush1.msra.mxu0 %v19
  %238 = vmatprep.subr.mxu0 0.0
  %239 = vmatpush2.msra.mxu0 0.0
  %240 = vmatprep.subr.mxu0 0.0
  %241 = vmatpush2.msra.mxu0 0.0
  %242 = vmatprep.subr.mxu0 0.0
  %243 = vmatpush2.msra.mxu0 0.0
  %244 = vmatprep.subr.mxu0 0.0
  %245 = vmatpush2.msra.mxu0 0.0
  %246 = vmatprep.subr.mxu0 0.0
  %247 = vmatpush2.msra.mxu0 0.0
  %248 = vmatprep.subr.mxu0 0.0
  %249 = vmatpush2.msra.mxu0 0.0
  %250 = vmatprep.subr.mxu0 0.0
  %251 = vmatpush2.msra.mxu0 0.0
  %252 = vmatprep.subr.mxu0 0.0
  %253 = vmatpush2.msra.mxu0 0.0
  %254 = vmatprep.subr.mxu0 0.0
  %255 = vmatpush2.msra.mxu0 0.0
  %256 = vmatprep.subr.mxu0 0.0
  %257 = vmatpush2.msra.mxu0 0.0
  %258 = vmatprep.subr.mxu0 0.0
  %259 = vmatpush2.msra.mxu0 0.0
  %260 = vmatprep.subr.mxu0 0.0
  %261 = vmatpush2.msra.mxu0 0.0
  %262 = vmatprep.subr.mxu0 0.0
  %263 = vmatpush2.msra.mxu0 0.0
  %264 = vmatprep.subr.mxu0 0.0
  %265 = vmatpush2.msra.mxu0 0.0
  %266 = vmatprep.subr.mxu0 0.0
  %267 = vmatpush2.msra.mxu0 0.0
  %268 = vmatprep.subr.mxu0 0.0
  %269 = vmatpush2.msra.mxu0 0.0
  %270 = vmatprep.mubr.f32.mxu0 0.0
  %271 = vmatmul.mubr.f32.gmra.mxu0 %v62
  %v272 = vpop.f32.mrf.mxu0
  %v273 = vadd.f32 0.0, %v272
  %v274 = vpop.f32.mrf.mxu0
  %275 = vdwg.mxu0
  %v276 = vmax.f32 %v131, 0.0
  %v277 = vmax.f32 %v133, 0.0
  %v278 = vmax.f32 %v202, 0.0
  %v279 = vmax.f32 %v204, 0.0
  %v280 = vmax.f32 %v273, 0.0
  %281 = vst [vmem:[#allocation2] sm:$0xff] %v276
  %282 = vst [vmem:[#allocation2 + $0x8] sm:$0xff] %v277
  %283 = vst [vmem:[#allocation2 + $0x10] sm:$0xff] %v278
  %284 = vst [vmem:[#allocation2 + $0x18] sm:$0xff] %v279
  %290 = vrot.lane.b32.xlu0 %v276, 127
  %v291 = vpop.permute.xlu0 %290
  %292 = vrot.lane.b32.xlu0 %v277, 127
  %v293 = vpop.permute.xlu0 %292
  %294 = vrot.lane.b32.xlu0 %v278, 127
  %v295 = vpop.permute.xlu0 %294
  %296 = vrot.lane.b32.xlu0 %v279, 127
  %v297 = vpop.permute.xlu0 %296
  %298 = vrot.lane.b32.xlu0 %v280, 127
  %v299 = vpop.permute.xlu0 %298
  %vm300 = vcmask 1039360
  %v301 = vsel %vm300, %v291, %v293
  %v302 = vsel %vm300, %v293, %v295
  %v303 = vsel %vm300, %v295, %v297
  %v304 = vsel %vm300, %v297, %v299
  %309 = vst [vmem:[#allocation2 + $0x20] sm:$0xff] %v301
  %310 = vst [vmem:[#allocation2 + $0x28] sm:$0xff] %v302
  %311 = vst [vmem:[#allocation2 + $0x30] sm:$0xff] %v303
  %312 = vst [vmem:[#allocation2 + $0x38] sm:$0xff] %v304
  %313 = vrot.lane.b32.xlu0 %v276, 126
  %v314 = vpop.permute.xlu0 %313
  %315 = vrot.lane.b32.xlu0 %v277, 126
  %v316 = vpop.permute.xlu0 %315
  %317 = vrot.lane.b32.xlu0 %v278, 126
  %v318 = vpop.permute.xlu0 %317
  %319 = vrot.lane.b32.xlu0 %v279, 126
  %v320 = vpop.permute.xlu0 %319
  %321 = vrot.lane.b32.xlu0 %v280, 126
  %v322 = vpop.permute.xlu0 %321
  %vm323 = vcmask 1031168
  %v324 = vsel %vm323, %v314, %v316
  %v325 = vsel %vm323, %v316, %v318
  %v326 = vsel %vm323, %v318, %v320
  %v327 = vsel %vm323, %v320, %v322
  %332 = vst [vmem:[#allocation2 + $0x40] sm:$0xff] %v324
  %333 = vst [vmem:[#allocation2 + $0x48] sm:$0xff] %v325
  %334 = vst [vmem:[#allocation2 + $0x50] sm:$0xff] %v326
  %335 = vst [vmem:[#allocation2 + $0x58] sm:$0xff] %v327
  %336 = vrot.lane.b32.xlu0 %v276, 112
  %v337 = vpop.permute.xlu0 %336
  %338 = vrot.lane.b32.xlu0 %v277, 112
  %v339 = vpop.permute.xlu0 %338
  %340 = vrot.lane.b32.xlu0 %v278, 112
  %v341 = vpop.permute.xlu0 %340
  %342 = vrot.lane.b32.xlu0 %v279, 112
  %v343 = vpop.permute.xlu0 %342
  %344 = vrot.lane.b32.xlu0 %v280, 112
  %v345 = vpop.permute.xlu0 %344
  %vm346 = vcmask 916480
  %v347 = vsel %vm346, %v337, %v339
  %v348 = vsel %vm346, %v339, %v341
  %v349 = vsel %vm346, %v341, %v343
  %v350 = vsel %vm346, %v343, %v345
  %355 = vst [vmem:[#allocation2 + $0x60] sm:$0xff] %v347
  %356 = vst [vmem:[#allocation2 + $0x68] sm:$0xff] %v348
  %357 = vst [vmem:[#allocation2 + $0x70] sm:$0xff] %v349
  %358 = vst [vmem:[#allocation2 + $0x78] sm:$0xff] %v350
  %359 = vrot.lane.b32.xlu0 %v276, 111
  %v360 = vpop.permute.xlu0 %359
  %361 = vrot.lane.b32.xlu0 %v277, 111
  %v362 = vpop.permute.xlu0 %361
  %363 = vrot.lane.b32.xlu0 %v278, 111
  %v364 = vpop.permute.xlu0 %363
  %365 = vrot.lane.b32.xlu0 %v279, 111
  %v366 = vpop.permute.xlu0 %365
  %367 = vrot.lane.b32.xlu0 %v280, 111
  %v368 = vpop.permute.xlu0 %367
  %vm369 = vcmask 908288
  %v370 = vsel %vm369, %v360, %v362
  %v371 = vsel %vm369, %v362, %v364
  %v372 = vsel %vm369, %v364, %v366
  %v373 = vsel %vm369, %v366, %v368
  %378 = vst [vmem:[#allocation2 + $0x80] sm:$0xff] %v370
  %379 = vst [vmem:[#allocation2 + $0x88] sm:$0xff] %v371
  %380 = vst [vmem:[#allocation2 + $0x90] sm:$0xff] %v372
  %381 = vst [vmem:[#allocation2 + $0x98] sm:$0xff] %v373
  %382 = vrot.lane.b32.xlu0 %v276, 110
  %v383 = vpop.permute.xlu0 %382
  %384 = vrot.lane.b32.xlu0 %v277, 110
  %v385 = vpop.permute.xlu0 %384
  %386 = vrot.lane.b32.xlu0 %v278, 110
  %v387 = vpop.permute.xlu0 %386
  %388 = vrot.lane.b32.xlu0 %v279, 110
  %v389 = vpop.permute.xlu0 %388
  %390 = vrot.lane.b32.xlu0 %v280, 110
  %v391 = vpop.permute.xlu0 %390
  %vm392 = vcmask 900096
  %v393 = vsel %vm392, %v383, %v385
  %v394 = vsel %vm392, %v385, %v387
  %v395 = vsel %vm392, %v387, %v389
  %v396 = vsel %vm392, %v389, %v391
  %401 = vst [vmem:[#allocation2 + $0xa0] sm:$0xff] %v393
  %402 = vst [vmem:[#allocation2 + $0xa8] sm:$0xff] %v394
  %403 = vst [vmem:[#allocation2 + $0xb0] sm:$0xff] %v395
  %404 = vst [vmem:[#allocation2 + $0xb8] sm:$0xff] %v396
  %405 = vrot.lane.b32.xlu0 %v276, 96
  %v406 = vpop.permute.xlu0 %405
  %407 = vrot.lane.b32.xlu0 %v277, 96
  %v408 = vpop.permute.xlu0 %407
  %409 = vrot.lane.b32.xlu0 %v278, 96
  %v410 = vpop.permute.xlu0 %409
  %411 = vrot.lane.b32.xlu0 %v279, 96
  %v412 = vpop.permute.xlu0 %411
  %413 = vrot.lane.b32.xlu0 %v280, 96
  %v414 = vpop.permute.xlu0 %413
  %vm415 = vcmask 785408
  %v416 = vsel %vm415, %v406, %v408
  %v417 = vsel %vm415, %v408, %v410
  %v418 = vsel %vm415, %v410, %v412
  %v419 = vsel %vm415, %v412, %v414
  %424 = vst [vmem:[#allocation2 + $0xc0] sm:$0xff] %v416
  %425 = vst [vmem:[#allocation2 + $0xc8] sm:$0xff] %v417
  %426 = vst [vmem:[#allocation2 + $0xd0] sm:$0xff] %v418
  %427 = vst [vmem:[#allocation2 + $0xd8] sm:$0xff] %v419
  %428 = vrot.lane.b32.xlu0 %v276, 95
  %v429 = vpop.permute.xlu0 %428
  %430 = vrot.lane.b32.xlu0 %v277, 95
  %v431 = vpop.permute.xlu0 %430
  %432 = vrot.lane.b32.xlu0 %v278, 95
  %v433 = vpop.permute.xlu0 %432
  %434 = vrot.lane.b32.xlu0 %v279, 95
  %v435 = vpop.permute.xlu0 %434
  %436 = vrot.lane.b32.xlu0 %v280, 95
  %v437 = vpop.permute.xlu0 %436
  %vm438 = vcmask 777216
  %v439 = vsel %vm438, %v429, %v431
  %v440 = vsel %vm438, %v431, %v433
  %v441 = vsel %vm438, %v433, %v435
  %v442 = vsel %vm438, %v435, %v437
  %447 = vst [vmem:[#allocation2 + $0xe0] sm:$0xff] %v439
  %448 = vst [vmem:[#allocation2 + $0xe8] sm:$0xff] %v440
  %449 = vst [vmem:[#allocation2 + $0xf0] sm:$0xff] %v441
  %450 = vst [vmem:[#allocation2 + $0xf8] sm:$0xff] %v442
  %451 = vrot.lane.b32.xlu0 %v276, 94
  %v452 = vpop.permute.xlu0 %451
  %453 = vrot.lane.b32.xlu0 %v277, 94
  %v454 = vpop.permute.xlu0 %453
  %455 = vrot.lane.b32.xlu0 %v278, 94
  %v456 = vpop.permute.xlu0 %455
  %457 = vrot.lane.b32.xlu0 %v279, 94
  %v458 = vpop.permute.xlu0 %457
  %459 = vrot.lane.b32.xlu0 %v280, 94
  %v460 = vpop.permute.xlu0 %459
  %vm461 = vcmask 769024
  %v462 = vsel %vm461, %v452, %v454
  %v463 = vsel %vm461, %v454, %v456
  %v464 = vsel %vm461, %v456, %v458
  %v465 = vsel %vm461, %v458, %v460
  %470 = vst [vmem:[#allocation2 + $0x100] sm:$0xff] %v462
  %471 = vst [vmem:[#allocation2 + $0x108] sm:$0xff] %v463
  %472 = vst [vmem:[#allocation2 + $0x110] sm:$0xff] %v464
  %473 = vst [vmem:[#allocation2 + $0x118] sm:$0xff] %v465
  %v474 = vld [vmem:[%s2] sm:$0xff]
  %v475 = vld [vmem:[%s2 + $0x8] sm:$0xff]
  %v476 = vld [vmem:[#allocation2] sm:$0xff]
  %v477 = vld [vmem:[#allocation2 + $0x8] sm:$0xff]
  %v478 = vld [vmem:[#allocation2 + $0x10] sm:$0xff]
  %v479 = vld [vmem:[#allocation2 + $0x18] sm:$0xff]
  %v480 = vld [vmem:[#allocation2 + $0x20] sm:$0xff]
  %v481 = vld [vmem:[#allocation2 + $0x28] sm:$0xff]
  %v482 = vld [vmem:[#allocation2 + $0x30] sm:$0xff]
  %v483 = vld [vmem:[#allocation2 + $0x38] sm:$0xff]
  %v484 = vld [vmem:[#allocation2 + $0x40] sm:$0xff]
  %v485 = vld [vmem:[#allocation2 + $0x48] sm:$0xff]
  %v486 = vld [vmem:[#allocation2 + $0x50] sm:$0xff]
  %v487 = vld [vmem:[#allocation2 + $0x58] sm:$0xff]
  %v488 = vld [vmem:[#allocation2 + $0x60] sm:$0xff]
  %v489 = vld [vmem:[#allocation2 + $0x68] sm:$0xff]
  %v490 = vld [vmem:[#allocation2 + $0x70] sm:$0xff]
  %v491 = vld [vmem:[#allocation2 + $0x78] sm:$0xff]
  %v492 = vld [vmem:[#allocation2 + $0x80] sm:$0xff]
  %v493 = vld [vmem:[#allocation2 + $0x88] sm:$0xff]
  %v494 = vld [vmem:[#allocation2 + $0x90] sm:$0xff]
  %v495 = vld [vmem:[#allocation2 + $0x98] sm:$0xff]
  %v496 = vld [vmem:[#allocation2 + $0xa0] sm:$0xff]
  %v497 = vld [vmem:[#allocation2 + $0xa8] sm:$0xff]
  %v498 = vld [vmem:[#allocation2 + $0xb0] sm:$0xff]
  %v499 = vld [vmem:[#allocation2 + $0xb8] sm:$0xff]
  %v500 = vld [vmem:[#allocation2 + $0xc0] sm:$0xff]
  %v501 = vld [vmem:[#allocation2 + $0xc8] sm:$0xff]
  %v502 = vld [vmem:[#allocation2 + $0xd0] sm:$0xff]
  %v503 = vld [vmem:[#allocation2 + $0xd8] sm:$0xff]
  %v504 = vld [vmem:[#allocation2 + $0xe0] sm:$0xff]
  %v505 = vld [vmem:[#allocation2 + $0xe8] sm:$0xff]
  %v506 = vld [vmem:[#allocation2 + $0xf0] sm:$0xff]
  %v507 = vld [vmem:[#allocation2 + $0xf8] sm:$0xff]
  %v508 = vld [vmem:[#allocation2 + $0x100] sm:$0xff]
  %v509 = vld [vmem:[#allocation2 + $0x108] sm:$0xff]
  %v510 = vld [vmem:[#allocation2 + $0x110] sm:$0xff]
  %v511 = vld [vmem:[#allocation2 + $0x118] sm:$0xff]
  %v513 = vsel %vm60, %v474, 0
  %v516 = vsel %vm60, %v475, 0
  %518 = vmatprep.subr.mxu0 0.0
  %519 = vmatpush1.msra.mxu0 0.0
  %520 = vmatprep.subr.mxu0 0.0
  %521 = vmatpush1.msra.mxu0 0.0
  %522 = vmatprep.subr.mxu0 0.0
  %523 = vmatpush1.msra.mxu0 0.0
  %524 = vmatprep.subr.mxu0 0.0
  %525 = vmatpush1.msra.mxu0 0.0
  %526 = vmatprep.subr.mxu0 0.0
  %527 = vmatpush1.msra.mxu0 0.0
  %528 = vmatprep.subr.mxu0 0.0
  %529 = vmatpush1.msra.mxu0 0.0
  %530 = vmatprep.subr.mxu0 0.0
  %531 = vmatpush1.msra.mxu0 0.0
  %532 = vmatprep.subr.mxu0 %v509
  %533 = vmatpush1.msra.mxu0 %v508
  %534 = vmatprep.subr.mxu0 %v505
  %535 = vmatpush1.msra.mxu0 %v504
  %536 = vmatprep.subr.mxu0 %v501
  %537 = vmatpush1.msra.mxu0 %v500
  %538 = vmatprep.subr.mxu0 %v497
  %539 = vmatpush1.msra.mxu0 %v496
  %540 = vmatprep.subr.mxu0 %v493
  %541 = vmatpush1.msra.mxu0 %v492
  %542 = vmatprep.subr.mxu0 %v489
  %543 = vmatpush1.msra.mxu0 %v488
  %544 = vmatprep.subr.mxu0 %v485
  %545 = vmatpush1.msra.mxu0 %v484
  %546 = vmatprep.subr.mxu0 %v481
  %547 = vmatpush1.msra.mxu0 %v480
  %548 = vmatprep.subr.mxu0 %v477
  %549 = vmatpush1.msra.mxu0 %v476
  %550 = vmatprep.subr.mxu0 0.0
  %551 = vmatpush2.msra.mxu0 0.0
  %552 = vmatprep.subr.mxu0 0.0
  %553 = vmatpush2.msra.mxu0 0.0
  %554 = vmatprep.subr.mxu0 0.0
  %555 = vmatpush2.msra.mxu0 0.0
  %556 = vmatprep.subr.mxu0 0.0
  %557 = vmatpush2.msra.mxu0 0.0
  %558 = vmatprep.subr.mxu0 0.0
  %559 = vmatpush2.msra.mxu0 0.0
  %560 = vmatprep.subr.mxu0 0.0
  %561 = vmatpush2.msra.mxu0 0.0
  %562 = vmatprep.subr.mxu0 0.0
  %563 = vmatpush2.msra.mxu0 0.0
  %564 = vmatprep.subr.mxu0 0.0
  %565 = vmatpush2.msra.mxu0 0.0
  %566 = vmatprep.subr.mxu0 0.0
  %567 = vmatpush2.msra.mxu0 0.0
  %568 = vmatprep.subr.mxu0 0.0
  %569 = vmatpush2.msra.mxu0 0.0
  %570 = vmatprep.subr.mxu0 0.0
  %571 = vmatpush2.msra.mxu0 0.0
  %572 = vmatprep.subr.mxu0 0.0
  %573 = vmatpush2.msra.mxu0 0.0
  %574 = vmatprep.subr.mxu0 0.0
  %575 = vmatpush2.msra.mxu0 0.0
  %576 = vmatprep.subr.mxu0 0.0
  %577 = vmatpush2.msra.mxu0 0.0
  %578 = vmatprep.subr.mxu0 0.0
  %579 = vmatpush2.msra.mxu0 0.0
  %580 = vmatprep.subr.mxu0 0.0
  %581 = vmatpush2.msra.mxu0 0.0
  %582 = vmatprep.mubr.f32.mxu0 0.0
  %583 = vmatmul.mubr.f32.gmra.mxu0 %v513
  %v584 = vpop.f32.mrf.mxu0
  %v585 = vadd.f32 0.0, %v584
  %v586 = vpop.f32.mrf.mxu0
  %v587 = vadd.f32 0.0, %v586
  %588 = vmatprep.mubr.f32.mxu0 0.0
  %589 = vmatmul.mubr.f32.gmra.mxu0 %v516
  %v590 = vpop.f32.mrf.mxu0
  %v591 = vadd.f32 0.0, %v590
  %v592 = vpop.f32.mrf.mxu0
  %v593 = vadd.f32 0.0, %v592
  %594 = vdwg.mxu0
  %595 = vmatprep.subr.mxu0 0.0
  %596 = vmatpush1.msra.mxu0 0.0
  %597 = vmatprep.subr.mxu0 0.0
  %598 = vmatpush1.msra.mxu0 0.0
  %599 = vmatprep.subr.mxu0 0.0
  %600 = vmatpush1.msra.mxu0 0.0
  %601 = vmatprep.subr.mxu0 0.0
  %602 = vmatpush1.msra.mxu0 0.0
  %603 = vmatprep.subr.mxu0 0.0
  %604 = vmatpush1.msra.mxu0 0.0
  %605 = vmatprep.subr.mxu0 0.0
  %606 = vmatpush1.msra.mxu0 0.0
  %607 = vmatprep.subr.mxu0 0.0
  %608 = vmatpush1.msra.mxu0 0.0
  %609 = vmatprep.subr.mxu0 %v511
  %610 = vmatpush1.msra.mxu0 %v510
  %611 = vmatprep.subr.mxu0 %v507
  %612 = vmatpush1.msra.mxu0 %v506
  %613 = vmatprep.subr.mxu0 %v503
  %614 = vmatpush1.msra.mxu0 %v502
  %615 = vmatprep.subr.mxu0 %v499
  %616 = vmatpush1.msra.mxu0 %v498
  %617 = vmatprep.subr.mxu0 %v495
  %618 = vmatpush1.msra.mxu0 %v494
  %619 = vmatprep.subr.mxu0 %v491
  %620 = vmatpush1.msra.mxu0 %v490
  %621 = vmatprep.subr.mxu0 %v487
  %622 = vmatpush1.msra.mxu0 %v486
  %623 = vmatprep.subr.mxu0 %v483
  %624 = vmatpush1.msra.mxu0 %v482
  %625 = vmatprep.subr.mxu0 %v479
  %626 = vmatpush1.msra.mxu0 %v478
  %627 = vmatprep.subr.mxu0 0.0
  %628 = vmatpush2.msra.mxu0 0.0
  %629 = vmatprep.subr.mxu0 0.0
  %630 = vmatpush2.msra.mxu0 0.0
  %631 = vmatprep.subr.mxu0 0.0
  %632 = vmatpush2.msra.mxu0 0.0
  %633 = vmatprep.subr.mxu0 0.0
  %634 = vmatpush2.msra.mxu0 0.0
  %635 = vmatprep.subr.mxu0 0.0
  %636 = vmatpush2.msra.mxu0 0.0
  %637 = vmatprep.subr.mxu0 0.0
  %638 = vmatpush2.msra.mxu0 0.0
  %639 = vmatprep.subr.mxu0 0.0
  %640 = vmatpush2.msra.mxu0 0.0
  %641 = vmatprep.subr.mxu0 0.0
  %642 = vmatpush2.msra.mxu0 0.0
  %643 = vmatprep.subr.mxu0 0.0
  %644 = vmatpush2.msra.mxu0 0.0
  %645 = vmatprep.subr.mxu0 0.0
  %646 = vmatpush2.msra.mxu0 0.0
  %647 = vmatprep.subr.mxu0 0.0
  %648 = vmatpush2.msra.mxu0 0.0
  %649 = vmatprep.subr.mxu0 0.0
  %650 = vmatpush2.msra.mxu0 0.0
  %651 = vmatprep.subr.mxu0 0.0
  %652 = vmatpush2.msra.mxu0 0.0
  %653 = vmatprep.subr.mxu0 0.0
  %654 = vmatpush2.msra.mxu0 0.0
  %655 = vmatprep.subr.mxu0 0.0
  %656 = vmatpush2.msra.mxu0 0.0
  %657 = vmatprep.subr.mxu0 0.0
  %658 = vmatpush2.msra.mxu0 0.0
  %659 = vmatprep.mubr.f32.mxu0 0.0
  %660 = vmatmul.mubr.f32.gmra.mxu0 %v513
  %v661 = vpop.f32.mrf.mxu0
  %v662 = vadd.f32 0.0, %v661
  %v663 = vpop.f32.mrf.mxu0
  %v664 = vadd.f32 0.0, %v663
  %665 = vmatprep.mubr.f32.mxu0 0.0
  %666 = vmatmul.mubr.f32.gmra.mxu0 %v516
  %v667 = vpop.f32.mrf.mxu0
  %v668 = vadd.f32 0.0, %v667
  %v669 = vpop.f32.mrf.mxu0
  %v670 = vadd.f32 0.0, %v669
  %671 = vdwg.mxu0
  %v672 = vmax.f32 %v585, 0.0
  %v673 = vmax.f32 %v587, 0.0
  %v674 = vmax.f32 %v662, 0.0
  %v675 = vmax.f32 %v664, 0.0
  %v676 = vmax.f32 %v591, 0.0
  %v677 = vmax.f32 %v593, 0.0
  %v678 = vmax.f32 %v668, 0.0
  %v679 = vmax.f32 %v670, 0.0
  %680 = vst [vmem:[%s3] sm:$0xff] %v672
  %681 = vst [vmem:[%s3 + $0x8] sm:$0xff] %v673
  %682 = vst [vmem:[%s3 + $0x10] sm:$0xff] %v674
  %683 = vst [vmem:[%s3 + $0x18] sm:$0xff] %v675
  %684 = vst [vmem:[%s3 + $0x20] sm:$0xff] %v676
  %685 = vst [vmem:[%s3 + $0x28] sm:$0xff] %v677
  %686 = vst [vmem:[%s3 + $0x30] sm:$0xff] %v678
  %687 = vst [vmem:[%s3 + $0x38] sm:$0xff] %v679
  // Predicated region
  $region14: #{baz_forward.1} parent=0 // pred_check
    _
  $region15: #{baz_forward.1} parent=0 // pred_check_branch
    %689 = sbr.rel (0) target = $region17
  $region16: #{baz_forward.1} parent=0 // pred_region
    _
  $region17: #{baz_forward.1} parent=0 // pred_fallthru
    _
  // Predicated region
  $region18: #{baz_forward.1} parent=0 // pred_check
    _
  $region19: #{baz_forward.1} parent=0 // pred_check_branch
    %691 = sbr.rel (0) target = $region21
  $region20: #{baz_forward.1} parent=0 // pred_region
    _
  $region21: #{baz_forward.1} parent=0 // pred_fallthru
    _

</llo_original>
